<compile_context>
chip_gen: v7x
topology: tpu7x:2x2x1
jax: 0.10.0
libtpu: 0.0.40
codegen_flags: <defaults>
</compile_context>

<pallas_src>
import functools

import jax
import jax.numpy as jnp
from jax.experimental import pallas as pl
from jax.experimental.pallas import tpu as pltpu

# Small, module-consistent sizes: (seq, batch, hidden) input, hidden->hidden linear.
S, B = 8, 2
IN_F, OUT_F = 128, 128        # lane-dense (multiples of 128)
EPS = 1e-5

MAX_ROW_TILE = 512            # ~85% HBM roofline in measured sweeps; also the
                              # v7x gate: >=512 rows/core before a 2-way split pays.
_VMEM_SAFE_DEFAULT = 16 * 1024 * 1024   # most conservative default scoped limit (v5e)


# ----------------------------- Pallas kernel ---------------------------------
def ln_linear_kernel(x_ref, g_ref, b_ref, wt_ref, bias_ref, o_ref, *, eps):
    """One row tile: y = LayerNorm(x) @ W^T + bias  (W^T pre-transposed outside)."""
    x = x_ref[...]                                        # (TM, IN) f32
    mu = jnp.mean(x, axis=-1, keepdims=True)
    var = jnp.mean(jnp.square(x - mu), axis=-1, keepdims=True)
    xn = (x - mu) * jax.lax.rsqrt(var + eps)
    a = xn * g_ref[...] + b_ref[...]                      # (1, IN) broadcasts
    # TODO(synk): on v6e/v7x, cast `a` and W^T to bf16 (keep f32 accumulation) to
    # halve operand traffic — skipped to keep exact f32 PyTorch numerics (1e-4 tol).
    o_ref[...] = (
        jnp.dot(a, wt_ref[...], preferred_element_type=jnp.float32)
        + bias_ref[...]
    )


# ----------------------------- tiling policy ----------------------------------
def _round_up(v, mult):
    return ((v + mult - 1) // mult) * mult


def _pick_row_tile(m, max_tile=MAX_ROW_TILE):
    """Largest row tile (multiple of 8) up to max_tile. Small inputs get a single
    grid step — no forced >=2-step split (pure overhead on single-TC v5e/v6e,
    and on v7x splitting only pays once per-core rows reach ~max_tile)."""
    if m <= max_tile:
        return _round_up(max(m, 8), 8)
    return max_tile


# --------------------------- one-time param prep -------------------------------
def prepare_params(gamma, beta, weight, bias):
    """Hoisted out of the per-call traced path: weight transposed ONCE to
    (in_features, out_features); gamma/beta/bias reshaped to lane rows."""
    in_f = gamma.shape[-1]
    out_f = bias.shape[-1]
    return (
        jnp.asarray(gamma, jnp.float32).reshape(1, in_f),
        jnp.asarray(beta, jnp.float32).reshape(1, in_f),
        jnp.asarray(weight, jnp.float32).T,          # (IN, OUT), done once
        jnp.asarray(bias, jnp.float32).reshape(1, out_f),
    )


# ------------------------------ JAX wrapper -----------------------------------
@functools.partial(jax.jit, static_argnames=("eps",))
def layernorm_linear(x, g2, b2, w_t, bias2, eps=EPS):
    """x: (..., in_features) f32; params already prepared by prepare_params()."""
    in_f = x.shape[-1]
    out_f = w_t.shape[-1]

    # Layout plumbing in the wrapper (free / contiguous), not the kernel hot path.
    x2d = x.reshape(-1, in_f)                 # (tokens, IN)
    m = x2d.shape[0]
    tm = _pick_row_tile(m)
    m_pad = _round_up(m, tm)
    if m_pad != m:
        # Tail handling: pad rows (zeros are benign through LN) and slice after.
        x2d = jnp.pad(x2d, ((0, m_pad - m), (0, 0)))
    grid_m = m_pad // tm

    # VMEM budget: double-buffered x/out row tiles + double-buffered resident
    # params. Only raise the scoped limit when we'd exceed the conservative
    # default; cap well below physical VMEM on all chips.
    vmem_bytes = 4 * (2 * tm * (in_f + out_f) + 2 * in_f * out_f + 4 * (in_f + out_f))
    vmem_limit = None
    if vmem_bytes > _VMEM_SAFE_DEFAULT // 2:
        vmem_limit = min(int(vmem_bytes * 2), 96 * 1024 * 1024)
    # TODO(synk): for very large in_f*out_f (v7x's 64 MiB VMEM) add a second grid
    # axis over out_f and single-buffer the resident weight (pl.Buffered(1)).

    cost = pl.CostEstimate(
        flops=2 * m_pad * in_f * out_f + 10 * m_pad * in_f,
        transcendentals=m_pad,
        bytes_accessed=4 * (m_pad * in_f + in_f * out_f + m_pad * out_f
                            + 2 * in_f + out_f),
    )

    out2d = pl.pallas_call(
        functools.partial(ln_linear_kernel, eps=eps),
        out_shape=jax.ShapeDtypeStruct((m_pad, out_f), jnp.float32),
        grid_spec=pltpu.PrefetchScalarGridSpec(
            num_scalar_prefetch=0,
            grid=(grid_m,),
            in_specs=[
                pl.BlockSpec((tm, in_f), lambda i: (i, 0)),     # x row tile
                pl.BlockSpec((1, in_f), lambda i: (0, 0)),      # gamma (resident)
                pl.BlockSpec((1, in_f), lambda i: (0, 0)),      # beta  (resident)
                pl.BlockSpec((in_f, out_f), lambda i: (0, 0)),  # W^T   (resident)
                pl.BlockSpec((1, out_f), lambda i: (0, 0)),     # bias  (resident)
            ],
            out_specs=pl.BlockSpec((tm, out_f), lambda i: (i, 0)),
        ),
        compiler_params=pltpu.CompilerParams(
            dimension_semantics=("parallel",),
            vmem_limit_bytes=vmem_limit,
        ),
        cost_estimate=cost,
    )(x2d, g2, b2, w_t, bias2)

    if m_pad != m:
        out2d = out2d[:m]
    return out2d.reshape(*x.shape[:-1], out_f)


# --------------------------- pure-JAX reference --------------------------------
def _reference(x, gamma, beta, weight, bias, eps=EPS):
    mu = jnp.mean(x, axis=-1, keepdims=True)
    var = jnp.mean(jnp.square(x - mu), axis=-1, keepdims=True)
    a = (x - mu) * jax.lax.rsqrt(var + eps) * gamma + beta
    return jnp.einsum("...i,oi->...o", a, weight) + bias


# ----------------------------------- main --------------------------------------
if __name__ == "__main__":
    key = jax.random.PRNGKey(0)
    kx, kg, kb, kw, kbi = jax.random.split(key, 5)

    x = jax.random.normal(kx, (S, B, IN_F), jnp.float32)
    gamma = 1.0 + 0.1 * jax.random.normal(kg, (IN_F,), jnp.float32)    # LN weight
    beta = 0.1 * jax.random.normal(kb, (IN_F,), jnp.float32)           # LN bias
    weight = 0.02 * jax.random.normal(kw, (OUT_F, IN_F), jnp.float32)  # Linear weight
    bias = 0.02 * jax.random.normal(kbi, (OUT_F,), jnp.float32)        # Linear bias

    # One-time prep (weight transpose hoisted out of the per-call path).
    g2, b2, w_t, bias2 = prepare_params(gamma, beta, weight, bias)

    out = jax.block_until_ready(layernorm_linear(x, g2, b2, w_t, bias2))
    ref = jax.block_until_ready(_reference(x, gamma, beta, weight, bias))

    assert out.shape == (S, B, OUT_F) and out.dtype == jnp.float32
    assert jnp.allclose(out, ref, atol=1e-4, rtol=1e-4), "mismatch vs reference"
    print("KERNEL_OK")
</pallas_src>

<mosaic_0001>
module attributes {stable_mosaic.version = 11 : i64} {
  func.func @ln_linear_kernel(%arg0: i32, %arg1: memref<16x128xf32, #tpu.memory_space<vmem>>, %arg2: memref<1x128xf32, #tpu.memory_space<vmem>>, %arg3: memref<1x128xf32, #tpu.memory_space<vmem>>, %arg4: memref<128x128xf32, #tpu.memory_space<vmem>>, %arg5: memref<1x128xf32, #tpu.memory_space<vmem>>, %arg6: memref<16x128xf32, #tpu.memory_space<vmem>>) attributes {dimension_semantics = [#tpu.dimension_semantics<parallel>], iteration_bounds = array<i64: 1>, scalar_prefetch = 0 : i64, scratch_operands = 0 : i64, tpu.core_type = #tpu.core_type<tc>, window_params = [{transform_indices = @transform_0, window_bounds = array<i64: 16, 128>}, {pipeline_mode = #tpu.pipeline_mode<synchronous>, transform_indices = @transform_1, window_bounds = array<i64: 1, 128>}, {pipeline_mode = #tpu.pipeline_mode<synchronous>, transform_indices = @transform_2, window_bounds = array<i64: 1, 128>}, {pipeline_mode = #tpu.pipeline_mode<synchronous>, transform_indices = @transform_3, window_bounds = array<i64: 128, 128>}, {pipeline_mode = #tpu.pipeline_mode<synchronous>, transform_indices = @transform_4, window_bounds = array<i64: 1, 128>}, {transform_indices = @transform_5, window_bounds = array<i64: 16, 128>}]} {
    %c0 = arith.constant 0 : index
    %c0_0 = arith.constant 0 : index
    %0 = vector.load %arg1[%c0, %c0_0] : memref<16x128xf32, #tpu.memory_space<vmem>>, vector<16x128xf32>
    %cst = arith.constant dense<0.000000e+00> : vector<16xf32>
    %1 = vector.multi_reduction <add>, %0, %cst [1] : vector<16x128xf32> to vector<16xf32>
    %2 = vector.shape_cast %1 : vector<16xf32> to vector<16x1xf32>
    %cst_1 = arith.constant 1.280000e+02 : f32
    %3 = vector.broadcast %cst_1 : f32 to vector<16x1xf32>
    %4 = arith.divf %2, %3 : vector<16x1xf32>
    %5 = vector.broadcast %4 : vector<16x1xf32> to vector<16x128xf32>
    %6 = arith.subf %0, %5 : vector<16x128xf32>
    %7 = arith.mulf %6, %6 : vector<16x128xf32>
    %cst_2 = arith.constant dense<0.000000e+00> : vector<16xf32>
    %8 = vector.multi_reduction <add>, %7, %cst_2 [1] : vector<16x128xf32> to vector<16xf32>
    %9 = vector.shape_cast %8 : vector<16xf32> to vector<16x1xf32>
    %cst_3 = arith.constant 1.280000e+02 : f32
    %10 = vector.broadcast %cst_3 : f32 to vector<16x1xf32>
    %11 = arith.divf %9, %10 : vector<16x1xf32>
    %12 = vector.broadcast %4 : vector<16x1xf32> to vector<16x128xf32>
    %13 = arith.subf %0, %12 : vector<16x128xf32>
    %cst_4 = arith.constant 9.99999974E-6 : f32
    %14 = vector.broadcast %cst_4 : f32 to vector<16x1xf32>
    %15 = arith.addf %11, %14 : vector<16x1xf32>
    %16 = math.rsqrt %15 : vector<16x1xf32>
    %17 = vector.broadcast %16 : vector<16x1xf32> to vector<16x128xf32>
    %18 = arith.mulf %13, %17 : vector<16x128xf32>
    %c0_5 = arith.constant 0 : index
    %c0_6 = arith.constant 0 : index
    %19 = vector.load %arg2[%c0_5, %c0_6] : memref<1x128xf32, #tpu.memory_space<vmem>>, vector<1x128xf32>
    %20 = vector.broadcast %19 : vector<1x128xf32> to vector<16x128xf32>
    %21 = arith.mulf %18, %20 : vector<16x128xf32>
    %c0_7 = arith.constant 0 : index
    %c0_8 = arith.constant 0 : index
    %22 = vector.load %arg3[%c0_7, %c0_8] : memref<1x128xf32, #tpu.memory_space<vmem>>, vector<1x128xf32>
    %23 = vector.broadcast %22 : vector<1x128xf32> to vector<16x128xf32>
    %24 = arith.addf %21, %23 : vector<16x128xf32>
    %c0_9 = arith.constant 0 : index
    %c0_10 = arith.constant 0 : index
    %25 = vector.load %arg4[%c0_9, %c0_10] : memref<128x128xf32, #tpu.memory_space<vmem>>, vector<128x128xf32>
    %cst_11 = arith.constant dense<0.000000e+00> : vector<16x128xf32>
    %26 = tpu.matmul %24, %25, %cst_11 {dimension_numbers = #tpu.dot_dimension_numbers<[1], [0], [0], [1], [0, 0, 1, 1], [], []>} : vector<16x128xf32>, vector<128x128xf32>, vector<16x128xf32> -> vector<16x128xf32>
    %c0_12 = arith.constant 0 : index
    %c0_13 = arith.constant 0 : index
    %27 = vector.load %arg5[%c0_12, %c0_13] : memref<1x128xf32, #tpu.memory_space<vmem>>, vector<1x128xf32>
    %28 = vector.broadcast %27 : vector<1x128xf32> to vector<16x128xf32>
    %29 = arith.addf %26, %28 : vector<16x128xf32>
    %c0_14 = arith.constant 0 : index
    %c0_15 = arith.constant 0 : index
    %30 = vector.load %arg6[%c0_14, %c0_15] : memref<16x128xf32, #tpu.memory_space<vmem>>, vector<16x128xf32>
    tpu.vector_store %arg6[%c0_14, %c0_15], %29 {strides = array<i32>} : memref<16x128xf32, #tpu.memory_space<vmem>>, vector<16x128xf32>,
    return
  }
  func.func @transform_0(%arg0: i32) -> (i32, i32) {
    %c0_i32 = arith.constant 0 : i32
    %c0_i32_0 = arith.constant 0 : i32
    return %arg0, %c0_i32 : i32, i32
  }
  func.func @transform_1(%arg0: i32) -> (i32, i32) {
    %c0_i32 = arith.constant 0 : i32
    %c0_i32_0 = arith.constant 0 : i32
    %c0_i32_1 = arith.constant 0 : i32
    return %c0_i32, %c0_i32_0 : i32, i32
  }
  func.func @transform_2(%arg0: i32) -> (i32, i32) {
    %c0_i32 = arith.constant 0 : i32
    %c0_i32_0 = arith.constant 0 : i32
    %c0_i32_1 = arith.constant 0 : i32
    return %c0_i32, %c0_i32_0 : i32, i32
  }
  func.func @transform_3(%arg0: i32) -> (i32, i32) {
    %c0_i32 = arith.constant 0 : i32
    %c0_i32_0 = arith.constant 0 : i32
    %c0_i32_1 = arith.constant 0 : i32
    return %c0_i32, %c0_i32_0 : i32, i32
  }
  func.func @transform_4(%arg0: i32) -> (i32, i32) {
    %c0_i32 = arith.constant 0 : i32
    %c0_i32_0 = arith.constant 0 : i32
    %c0_i32_1 = arith.constant 0 : i32
    return %c0_i32, %c0_i32_0 : i32, i32
  }
  func.func @transform_5(%arg0: i32) -> (i32, i32) {
    %c0_i32 = arith.constant 0 : i32
    %c0_i32_0 = arith.constant 0 : i32
    return %arg0, %c0_i32 : i32, i32
  }
}

</mosaic_0001>

<llo_original>
// kernel: layernorm_linear.1
$region0: #{layernorm_linear.1}
  #allocation0 [shape = 'u32[]', space=smem, size = 0x4, offset = 0x4, fixed_abs, tag = 'smem constant byte address 0x4 - core index']
  #allocation1 [shape = 'u32[144,128]{1,0:T(1,128)}', space=vmem, size = 0x12000, scoped, tag = 'internal scratch']
  %s0 = inlined_call_operand.hbm [shape: f32[16,128], index: 0, kind: input, shape index: {}]
  %s1 = inlined_call_operand.vmem [shape: f32[1,128], index: 1, kind: input, shape index: {}]
  %s2 = inlined_call_operand.vmem [shape: f32[1,128], index: 2, kind: input, shape index: {}]
  %s3 = inlined_call_operand.hbm [shape: f32[128,128], index: 3, kind: input, shape index: {}]
  %s4 = inlined_call_operand.vmem [shape: f32[1,128], index: 4, kind: input, shape index: {}]
  %s5 = inlined_call_operand.hbm [shape: f32[16,128], index: 5, kind: output, shape index: {}]
  %s6 = sld [smem:[#allocation0]]
  $region38: #{layernorm_linear.1} parent=0
    _
  %s8 = ssub.s32 1, %s6
  %s9 = scalar_select 0, %s8, %s6
  $region1: #{layernorm_linear.1} parent=0
    #allocation2 [shape = 'u8[8192]{0}', space=vmem, size = 0x2000, scoped, tag = 'input window, operand 0, single buffered']
    #allocation3 [shape = 's32[1]{0}', space=sflag, size = 0x4, scoped, tag = 'scoped memory for layernorm_linear.1']
    #allocation4 [shape = 's32[1]{0}', space=sflag, size = 0x4, scoped, tag = 'scoped memory for layernorm_linear.1']
    #allocation5 [shape = 'u8[65536]{0}', space=vmem, size = 0x10000, scoped, tag = 'input window, operand 3, single buffered']
    #allocation6 [shape = 's32[1]{0}', space=sflag, size = 0x4, scoped, tag = 'scoped memory for layernorm_linear.1']
    #allocation7 [shape = 'u8[8192]{0}', space=vmem, size = 0x2000, scoped, tag = 'output window, operand 0, single buffered']
    %10 = vsyncpa [#allocation3], 0
    %11 = vsyncpa [#allocation6], 0
    %12 = vsyncpa [#allocation4], 0
    // Predicated region
    $region2: #{layernorm_linear.1} parent=1 // pred_check
      _
    $region3: #{layernorm_linear.1} parent=1 // pred_check_branch
      %14 = sbr.rel (0) target = $region5
    $region4: #{layernorm_linear.1} parent=1 // pred_region
      %s16 = ssub.s32 256, 256
      %17 = vsyncadd [#allocation3], %s16
      %s18 = sshll.u32 [#allocation2], 4
      %s19 = int_to_ptr.vmem [resolvable:$true] %s18
      %24 = dma.hbm_to_vmem [thread:$0]  %s0, 256, %s19, [#allocation3], 128, 128, 8
    $region5: #{layernorm_linear.1} parent=1 // pred_fallthru
      _
    // Predicated region
    $region6: #{layernorm_linear.1} parent=1 // pred_check
      _
    $region7: #{layernorm_linear.1} parent=1 // pred_check_branch
      %26 = sbr.rel (0) target = $region9
    $region8: #{layernorm_linear.1} parent=1 // pred_region
      _
    $region9: #{layernorm_linear.1} parent=1 // pred_fallthru
      _
    // Predicated region
    $region10: #{layernorm_linear.1} parent=1 // pred_check
      _
    $region11: #{layernorm_linear.1} parent=1 // pred_check_branch
      %28 = sbr.rel (0) target = $region13
    $region12: #{layernorm_linear.1} parent=1 // pred_region
      _
    $region13: #{layernorm_linear.1} parent=1 // pred_fallthru
      _
    // Predicated region
    $region14: #{layernorm_linear.1} parent=1 // pred_check
      _
    $region15: #{layernorm_linear.1} parent=1 // pred_check_branch
      %30 = sbr.rel (0) target = $region17
    $region16: #{layernorm_linear.1} parent=1 // pred_region
      %s32 = ssub.s32 2048, 2048
      %33 = vsyncadd [#allocation6], %s32
      %s34 = sshll.u32 [#allocation5], 4
      %s35 = int_to_ptr.vmem [resolvable:$true] %s34
      %40 = dma.hbm_to_vmem [thread:$0]  %s3, 2048, %s35, [#allocation6], 128, 128, 8
    $region17: #{layernorm_linear.1} parent=1 // pred_fallthru
      _
    // Predicated region
    $region18: #{layernorm_linear.1} parent=1 // pred_check
      _
    $region19: #{layernorm_linear.1} parent=1 // pred_check_branch
      %42 = sbr.rel (0) target = $region21
    $region20: #{layernorm_linear.1} parent=1 // pred_region
      _
    $region21: #{layernorm_linear.1} parent=1 // pred_fallthru
      _
    // Predicated region
    $region22: #{layernorm_linear.1} parent=1 // pred_check
      _
    $region23: #{layernorm_linear.1} parent=1 // pred_check_branch
      %44 = sbr.rel (0) target = $region25
    $region24: #{layernorm_linear.1} parent=1 // pred_region
      %45 = dma.done [#allocation3], 256
    $region25: #{layernorm_linear.1} parent=1 // pred_fallthru
      _
    // Predicated region
    $region26: #{layernorm_linear.1} parent=1 // pred_check
      _
    $region27: #{layernorm_linear.1} parent=1 // pred_check_branch
      %47 = sbr.rel (0) target = $region29
    $region28: #{layernorm_linear.1} parent=1 // pred_region
      %48 = dma.done [#allocation6], 2048
    $region29: #{layernorm_linear.1} parent=1 // pred_fallthru
      _
    %v49 = vld [vmem:[#allocation2] sm:$0xff]
    %v50 = vld [vmem:[#allocation2 + $0x8] sm:$0xff]
    %51 = vadd.xlane.f32.xlu0 %v49
    %v52 = vpop.xlane.xlu0 %51
    %53 = vadd.xlane.f32.xlu0 %v50
    %v54 = vpop.xlane.xlu0 %53
    %v55 = vrcp.pop 128.0
    %v56 = vmul.f32 %v52, %v55
    %v57 = vmul.f32 %v54, %v55
    %v58 = vsub.f32 %v49, %v56
    %v59 = vsub.f32 %v50, %v57
    %v60 = vmul.f32 %v58, %v58
    %v61 = vmul.f32 %v59, %v59
    %62 = vadd.xlane.f32.xlu0 %v60
    %v63 = vpop.xlane.xlu0 %62
    %64 = vadd.xlane.f32.xlu0 %v61
    %v65 = vpop.xlane.xlu0 %64
    %v66 = vmul.f32 %v63, %v55
    %v67 = vmul.f32 %v65, %v55
    %v68 = vadd.f32 %v66, 1e-05
    %v69 = vadd.f32 %v67, 1e-05
    %v70 = vrsqrt.pop %v68
    %v71 = vrsqrt.pop %v69
    %v72 = vmul.f32 %v58, %v70
    %v73 = vmul.f32 %v59, %v71
    %v74 = vld [vmem:[%s1] sm:$0x1]
    %v76 = vlaneseq
    %v77 = vshrl.u32 %v76, 7
    %v78 = vsub.s32 0, %v77
    %v79 = vrot.slane %v74, %v78
    %v81 = vmul.f32 %v72, %v79
    %v82 = vmul.f32 %v73, %v79
    %v83 = vld [vmem:[%s2] sm:$0x1]
    %v85 = vlaneseq
    %v86 = vshrl.u32 %v85, 7
    %v87 = vsub.s32 0, %v86
    %v88 = vrot.slane %v83, %v87
    %v90 = vadd.f32 %v81, %v88
    %v91 = vadd.f32 %v82, %v88
    %v92 = vld [vmem:[#allocation5] sm:$0xff]
    %v93 = vld [vmem:[#allocation5 + $0x8] sm:$0xff]
    %v94 = vld [vmem:[#allocation5 + $0x10] sm:$0xff]
    %v95 = vld [vmem:[#allocation5 + $0x18] sm:$0xff]
    %v96 = vld [vmem:[#allocation5 + $0x20] sm:$0xff]
    %v97 = vld [vmem:[#allocation5 + $0x28] sm:$0xff]
    %v98 = vld [vmem:[#allocation5 + $0x30] sm:$0xff]
    %v99 = vld [vmem:[#allocation5 + $0x38] sm:$0xff]
    %v100 = vld [vmem:[#allocation5 + $0x40] sm:$0xff]
    %v101 = vld [vmem:[#allocation5 + $0x48] sm:$0xff]
    %v102 = vld [vmem:[#allocation5 + $0x50] sm:$0xff]
    %v103 = vld [vmem:[#allocation5 + $0x58] sm:$0xff]
    %v104 = vld [vmem:[#allocation5 + $0x60] sm:$0xff]
    %v105 = vld [vmem:[#allocation5 + $0x68] sm:$0xff]
    %v106 = vld [vmem:[#allocation5 + $0x70] sm:$0xff]
    %v107 = vld [vmem:[#allocation5 + $0x78] sm:$0xff]
    %v108 = vld [vmem:[%s4] sm:$0x1]
    %v110 = vlaneseq
    %v111 = vshrl.u32 %v110, 7
    %v112 = vsub.s32 0, %v111
    %v113 = vrot.slane %v108, %v112
    %115 = vmatprep.subr.mxu0 0.0
    %116 = vmatpush1.msra.mxu0 %v92
    %117 = vmatprep.subr.mxu0 0.0
    %118 = vmatpush1.msra.mxu0 %v93
    %119 = vmatprep.subr.mxu0 0.0
    %120 = vmatpush1.msra.mxu0 %v94
    %121 = vmatprep.subr.mxu0 0.0
    %122 = vmatpush1.msra.mxu0 %v95
    %123 = vmatprep.subr.mxu0 0.0
    %124 = vmatpush1.msra.mxu0 %v96
    %125 = vmatprep.subr.mxu0 0.0
    %126 = vmatpush1.msra.mxu0 %v97
    %127 = vmatprep.subr.mxu0 0.0
    %128 = vmatpush1.msra.mxu0 %v98
    %129 = vmatprep.subr.mxu0 0.0
    %130 = vmatpush1.msra.mxu0 %v99
    %131 = vmatprep.subr.mxu0 0.0
    %132 = vmatpush1.msra.mxu0 %v100
    %133 = vmatprep.subr.mxu0 0.0
    %134 = vmatpush1.msra.mxu0 %v101
    %135 = vmatprep.subr.mxu0 0.0
    %136 = vmatpush1.msra.mxu0 %v102
    %137 = vmatprep.subr.mxu0 0.0
    %138 = vmatpush1.msra.mxu0 %v103
    %139 = vmatprep.subr.mxu0 0.0
    %140 = vmatpush1.msra.mxu0 %v104
    %141 = vmatprep.subr.mxu0 0.0
    %142 = vmatpush1.msra.mxu0 %v105
    %143 = vmatprep.subr.mxu0 0.0
    %144 = vmatpush1.msra.mxu0 %v106
    %145 = vmatprep.subr.mxu0 0.0
    %146 = vmatpush1.msra.mxu0 %v107
    %147 = vmatprep.subr.mxu0 0.0
    %148 = vmatpush1.msra.mxu0 0.0
    %149 = vmatprep.subr.mxu0 0.0
    %150 = vmatpush1.msra.mxu0 0.0
    %151 = vmatprep.subr.mxu0 0.0
    %152 = vmatpush1.msra.mxu0 0.0
    %153 = vmatprep.subr.mxu0 0.0
    %154 = vmatpush1.msra.mxu0 0.0
    %155 = vmatprep.subr.mxu0 0.0
    %156 = vmatpush1.msra.mxu0 0.0
    %157 = vmatprep.subr.mxu0 0.0
    %158 = vmatpush1.msra.mxu0 0.0
    %159 = vmatprep.subr.mxu0 0.0
    %160 = vmatpush1.msra.mxu0 0.0
    %161 = vmatprep.subr.mxu0 0.0
    %162 = vmatpush1.msra.mxu0 0.0
    %163 = vmatprep.subr.mxu0 0.0
    %164 = vmatpush1.msra.mxu0 0.0
    %165 = vmatprep.subr.mxu0 0.0
    %166 = vmatpush1.msra.mxu0 0.0
    %167 = vmatprep.subr.mxu0 0.0
    %168 = vmatpush1.msra.mxu0 0.0
    %169 = vmatprep.subr.mxu0 0.0
    %170 = vmatpush1.msra.mxu0 0.0
    %171 = vmatprep.subr.mxu0 0.0
    %172 = vmatpush1.msra.mxu0 0.0
    %173 = vmatprep.subr.mxu0 0.0
    %174 = vmatpush1.msra.mxu0 0.0
    %175 = vmatprep.subr.mxu0 0.0
    %176 = vmatpush1.msra.mxu0 0.0
    %177 = vmatprep.subr.mxu0 0.0
    %178 = vmatpush1.msra.mxu0 0.0
    %179 = vmatprep.mubr.f32.mxu0 0.0
    %180 = vmatmul.mubr.f32.gmra.mrb[0].mxu0 %v90
    %v181 = vpop.f32.mrb[0].mxu0
    %v182 = vadd.f32 %v113, %v181
    %v183 = vpop.f32.mrb[0].mxu0
    %184 = vmatprep.mubr.f32.mxu0 0.0
    %185 = vmatmul.mubr.f32.gmra.mrb[0].mxu0 %v91
    %v186 = vpop.f32.mrb[0].mxu0
    %v187 = vadd.f32 %v113, %v186
    %v188 = vpop.f32.mrb[0].mxu0
    %189 = vdwg.mxu0
    %190 = vst [vmem:[#allocation7] sm:$0xff] %v182
    %191 = vst [vmem:[#allocation7 + $0x8] sm:$0xff] %v187
    // Predicated region
    $region30: #{layernorm_linear.1} parent=1 // pred_check
      _
    $region31: #{layernorm_linear.1} parent=1 // pred_check_branch
      %193 = sbr.rel (0) target = $region33
    $region32: #{layernorm_linear.1} parent=1 // pred_region
      %s195 = ssub.s32 256, 256
      %196 = vsyncadd [#allocation4], %s195
      %s197 = sshll.u32 [#allocation7], 4
      %s198 = int_to_ptr.vmem [resolvable:$true] %s197
      %203 = dma.vmem_to_hbm [thread:$0]  %s198, 256, %s5, [#allocation4], 128, 128, 8
    $region33: #{layernorm_linear.1} parent=1 // pred_fallthru
      _
    // Predicated region
    $region34: #{layernorm_linear.1} parent=1 // pred_check
      _
    $region35: #{layernorm_linear.1} parent=1 // pred_check_branch
      %205 = sbr.rel (0) target = $region37
    $region36: #{layernorm_linear.1} parent=1 // pred_region
      %206 = dma.done [#allocation4], 256
    $region37: #{layernorm_linear.1} parent=1 // pred_fallthru
      _
    %207 = vsyncpa [#allocation3], 1
    %208 = vsyncpa [#allocation6], 1
    %209 = vsyncpa [#allocation4], 1

</llo_original>
